<compile_context>
chip_gen: v6e
topology: v6e:2x2x1
jax: 0.10.0
libtpu: 0.0.40
codegen_flags: <defaults>
</compile_context>

<pallas_src>
from functools import partial

import jax
import jax.numpy as jnp
from jax.experimental import pallas as pl
from jax.experimental.pallas import tpu as pltpu

_LANES = 128
_TARGET_BLOCK_BYTES = 4 * 1024 * 1024   # ~4 MiB per block; in+out double-buffered = 16 MiB live
_SPLIT_BYTES = 1 * 1024 * 1024          # only split mid-size tensors across the grid above ~1 MiB
_VMEM_LIMIT_BYTES = 32 * 1024 * 1024    # headroom over v5e's 16 MiB scoped default; < v7x 64 MiB physical


def _sigmoidq_kernel_fake(x_ref, o_ref):
    # fake=True branch: plain sigmoid (EUP exp + VPU).
    o_ref[...] = jax.nn.sigmoid(x_ref[...]).astype(o_ref.dtype)


def _sigmoidq_kernel_quant(x_ref, o_ref):
    # fake=False branch: forward value is hardtanh(x/4 + 1/2, 0, 1).
    x = x_ref[...]
    o_ref[...] = jnp.clip(x * 0.25 + 0.5, 0.0, 1.0).astype(o_ref.dtype)


def _sublane_multiple(dtype):
    # Native (sublane, 128) tiling: f32 -> 8, bf16/f16 -> 16, int8/fp8 -> 32.
    return max(8, 32 // jnp.dtype(dtype).itemsize)


def _likely_multi_tensorcore():
    """Heuristic: does a 'parallel' grid axis shard across >1 TensorCore?"""
    try:
        kind = jax.devices()[0].device_kind.lower()
    except Exception:
        return True
    # v5e / v6e ("lite") chips have a single TensorCore; everything else
    # (v4 megacore, v7x, ...) benefits from >= 2 grid blocks.
    return not any(t in kind for t in ("v5 lite", "v5e", "v6 lite", "v6e"))


def _pick_tile_rows(rows, dtype):
    itemsize = jnp.dtype(dtype).itemsize
    sub = _sublane_multiple(dtype)
    # ~4 MiB per block in bytes, independent of dtype:
    #   f32 -> 8192 rows, bf16 -> 16384 rows, int8 -> 32768 rows.
    max_tile_rows = _TARGET_BLOCK_BYTES // (_LANES * itemsize)
    total_bytes = rows * _LANES * itemsize

    if rows > max_tile_rows:
        tile_rows = max_tile_rows
        nblocks = pl.cdiv(rows, tile_rows)
        # Even block count keeps the two TensorCores of a megacore chip balanced.
        if nblocks > 1 and nblocks % 2 == 1 and _likely_multi_tensorcore():
            nblocks += 1
            tile_rows = max(sub, pl.cdiv(pl.cdiv(rows, nblocks), sub) * sub)
    elif total_bytes >= _SPLIT_BYTES and rows >= 2 * sub and _likely_multi_tensorcore():
        # Mid-size tensor on a megacore chip: split into ~2 blocks.
        tile_rows = max(sub, pl.cdiv(pl.cdiv(rows, 2), sub) * sub)
    else:
        # Small tensor (or single-TC chip): one block. block_shape == full array
        # dims, so any row count (even non-sublane-aligned) is a legal block.
        tile_rows = rows
    return tile_rows


def _sigmoid_q_forward(x, fake):
    """Pallas forward. x: any shape (NCHW for conv activations)."""
    orig_shape = x.shape
    orig_dtype = x.dtype

    flat = x.reshape(-1)
    n = flat.shape[0]

    # Pad only to lane width (128): at most 127 padded elements, and most NN
    # activation sizes hit the zero-copy no-pad / no-slice fast path.
    n_pad = pl.cdiv(n, _LANES) * _LANES
    padded = n_pad != n
    if padded:
        flat = jnp.pad(flat, (0, n_pad - n))

    x2d = flat.reshape(-1, _LANES)   # (rows, 128)
    rows = x2d.shape[0]

    tile_rows = _pick_tile_rows(rows, orig_dtype)
    grid = (pl.cdiv(rows, tile_rows),)
    kernel = _sigmoidq_kernel_fake if fake else _sigmoidq_kernel_quant

    out2d = pl.pallas_call(
        kernel,
        out_shape=jax.ShapeDtypeStruct((rows, _LANES), orig_dtype),
        grid=grid,
        in_specs=[pl.BlockSpec((tile_rows, _LANES), lambda i: (i, 0))],
        out_specs=pl.BlockSpec((tile_rows, _LANES), lambda i: (i, 0)),
        compiler_params=pltpu.CompilerParams(
            dimension_semantics=("parallel",),
            vmem_limit_bytes=_VMEM_LIMIT_BYTES),
    )(x2d)

    out_flat = out2d.reshape(-1)
    if padded:
        out_flat = out_flat[:n]
    return out_flat.reshape(orig_shape)


@partial(jax.custom_vjp, nondiff_argnums=(1,))
def sigmoid_q(x, fake):
    """SigmoidQ forward with straight-through sigmoid gradient."""
    return _sigmoid_q_forward(x, fake)


def _sigmoid_q_fwd(x, fake):
    return _sigmoid_q_forward(x, fake), x


def _sigmoid_q_bwd(fake, x, g):
    # Straight-through: gradient of sigmoid for BOTH branches
    # (that is the whole point of the fake=False formulation in the module).
    s = jax.nn.sigmoid(x)
    return (g * s * (1.0 - s),)


sigmoid_q.defvjp(_sigmoid_q_fwd, _sigmoid_q_bwd)


if __name__ == "__main__":
    key = jax.random.PRNGKey(0)
    k0, k1, k2, k3 = jax.random.split(key, 4)

    # NCHW conv-style activation: batch=2, channels=4, spatial=16x16
    # (2048 elems, multiple of 128 -> zero-copy path, single block).
    x = jax.random.normal(k0, (2, 4, 16, 16), dtype=jnp.float32) * 3.0

    # fake=False path (quantized hard-sigmoid forward value)
    y_quant = jax.block_until_ready(sigmoid_q(x, False))
    ref_quant = jnp.clip(x * 0.25 + 0.5, 0.0, 1.0)
    assert y_quant.shape == x.shape and y_quant.dtype == x.dtype
    assert jnp.max(jnp.abs(y_quant - ref_quant)) < 1e-6

    # fake=True path (plain sigmoid)
    y_fake = jax.block_until_ready(sigmoid_q(x, True))
    assert jnp.max(jnp.abs(y_fake - jax.nn.sigmoid(x))) < 1e-5

    # Odd-sized input: 2500 elems -> <=127-element pad, rows=20 (not a multiple
    # of 8) handled as a single full-dims block.
    x_odd = jax.random.normal(k1, (1, 1, 50, 50), dtype=jnp.float32) * 3.0
    y_odd = jax.block_until_ready(sigmoid_q(x_odd, False))
    assert y_odd.shape == x_odd.shape
    assert jnp.max(jnp.abs(y_odd - jnp.clip(x_odd * 0.25 + 0.5, 0.0, 1.0))) < 1e-6

    # bf16 (common training activation dtype): exercises the dtype-aware
    # (16, 128) sublane alignment.
    x_bf = (jax.random.normal(k2, (2, 8, 32, 32), dtype=jnp.float32) * 3.0
            ).astype(jnp.bfloat16)
    y_bf = jax.block_until_ready(sigmoid_q(x_bf, False))
    ref_bf = jnp.clip(x_bf * 0.25 + 0.5, 0.0, 1.0)
    assert y_bf.dtype == jnp.bfloat16 and y_bf.shape == x_bf.shape
    assert jnp.max(jnp.abs(y_bf.astype(jnp.float32)
                           - ref_bf.astype(jnp.float32))) < 1e-2

    # ~1 MiB tensor: triggers the 2-block split on megacore chips, single
    # block on v5e/v6e.
    x_mid = jax.random.normal(k3, (1, 16, 128, 128), dtype=jnp.float32) * 3.0
    y_mid = jax.block_until_ready(sigmoid_q(x_mid, False))
    assert jnp.max(jnp.abs(y_mid - jnp.clip(x_mid * 0.25 + 0.5, 0.0, 1.0))) < 1e-6

    # Straight-through gradient: both branches should give sigmoid'(x).
    g_quant = jax.block_until_ready(
        jax.grad(lambda a: jnp.sum(sigmoid_q(a, False)))(x))
    s = jax.nn.sigmoid(x)
    assert jnp.max(jnp.abs(g_quant - s * (1.0 - s))) < 1e-5

    print("KERNEL_OK")
</pallas_src>

<mosaic_0001>
module attributes {stable_mosaic.version = 11 : i64} {
  func.func @_sigmoidq_kernel_quant(%arg0: i32, %arg1: memref<16x128xf32, #tpu.memory_space<vmem>>, %arg2: memref<16x128xf32, #tpu.memory_space<vmem>>) attributes {dimension_semantics = [#tpu.dimension_semantics<parallel>], iteration_bounds = array<i64: 1>, scalar_prefetch = 0 : i64, scratch_operands = 0 : i64, tpu.core_type = #tpu.core_type<tc>, window_params = [{transform_indices = @transform_0, window_bounds = array<i64: 16, 128>}, {transform_indices = @transform_1, window_bounds = array<i64: 16, 128>}]} {
    %c0 = arith.constant 0 : index
    %c0_0 = arith.constant 0 : index
    %0 = vector.load %arg1[%c0, %c0_0] : memref<16x128xf32, #tpu.memory_space<vmem>>, vector<16x128xf32>
    %cst = arith.constant 2.500000e-01 : f32
    %1 = vector.broadcast %cst : f32 to vector<16x128xf32>
    %2 = arith.mulf %0, %1 : vector<16x128xf32>
    %cst_1 = arith.constant 5.000000e-01 : f32
    %3 = vector.broadcast %cst_1 : f32 to vector<16x128xf32>
    %4 = arith.addf %2, %3 : vector<16x128xf32>
    %cst_2 = arith.constant 0.000000e+00 : f32
    %cst_3 = arith.constant 1.000000e+00 : f32
    %5 = vector.broadcast %cst_2 : f32 to vector<16x128xf32>
    %6 = arith.maximumf %5, %4 : vector<16x128xf32>
    %7 = vector.broadcast %cst_3 : f32 to vector<16x128xf32>
    %8 = arith.minimumf %7, %6 : vector<16x128xf32>
    %c0_4 = arith.constant 0 : index
    %c0_5 = arith.constant 0 : index
    %9 = vector.load %arg2[%c0_4, %c0_5] : memref<16x128xf32, #tpu.memory_space<vmem>>, vector<16x128xf32>
    tpu.vector_store %arg2[%c0_4, %c0_5], %8 {strides = array<i32>} : memref<16x128xf32, #tpu.memory_space<vmem>>, vector<16x128xf32>,
    return
  }
  func.func @transform_0(%arg0: i32) -> (i32, i32) {
    %c0_i32 = arith.constant 0 : i32
    %c0_i32_0 = arith.constant 0 : i32
    return %arg0, %c0_i32 : i32, i32
  }
  func.func @transform_1(%arg0: i32) -> (i32, i32) {
    %c0_i32 = arith.constant 0 : i32
    %c0_i32_0 = arith.constant 0 : i32
    return %arg0, %c0_i32 : i32, i32
  }
}

</mosaic_0001>

<llo_original>
// kernel: tpu_custom_call.1
$region0: #{tpu_custom_call.1}
  #allocation0 [shape = 'u32[]', space=smem, size = 0x4, offset = 0x4, fixed_abs, tag = 'smem constant byte address 0x4 - core index']
  #allocation1 [shape = 'u32[144,128]{1,0:T(1,128)}', space=vmem, size = 0x12000, scoped, tag = 'internal scratch']
  %s0 = inlined_call_operand.hbm [shape: f32[16,128], index: 0, kind: input, shape index: {}]
  %s1 = inlined_call_operand.hbm [shape: f32[16,128], index: 1, kind: output, shape index: {}]
  %s2 = sld [smem:[#allocation0]]
  $region18: #{tpu_custom_call.1} parent=0
    _
  %s4 = ssub.s32 1, %s2
  %s5 = scalar_select 0, %s4, %s2
  $region1: #{tpu_custom_call.1} parent=0
    #allocation2 [shape = 'u8[8192]{0}', space=vmem, size = 0x2000, scoped, tag = 'input window, operand 0, single buffered']
    #allocation3 [shape = 's32[1]{0}', space=sflag, size = 0x4, scoped, tag = 'scoped memory for tpu_custom_call.1']
    #allocation4 [shape = 's32[1]{0}', space=sflag, size = 0x4, scoped, tag = 'scoped memory for tpu_custom_call.1']
    #allocation5 [shape = 'u8[8192]{0}', space=vmem, size = 0x2000, scoped, tag = 'output window, operand 0, single buffered']
    %6 = vsyncpa [#allocation3], 0
    %7 = vsyncpa [#allocation4], 0
    // Predicated region
    $region2: #{tpu_custom_call.1} parent=1 // pred_check
      _
    $region3: #{tpu_custom_call.1} parent=1 // pred_check_branch
      %9 = sbr.rel (0) target = $region5
    $region4: #{tpu_custom_call.1} parent=1 // pred_region
      %s11 = ssub.s32 256, 256
      %12 = vsyncadd [#allocation3], %s11
      %s13 = sshll.u32 [#allocation2], 4
      %s14 = int_to_ptr.vmem [resolvable:$true] %s13
      %19 = dma.hbm_to_vmem [thread:$0]  %s0, 256, %s14, [#allocation3], 128, 128, 8
    $region5: #{tpu_custom_call.1} parent=1 // pred_fallthru
      _
    // Predicated region
    $region6: #{tpu_custom_call.1} parent=1 // pred_check
      _
    $region7: #{tpu_custom_call.1} parent=1 // pred_check_branch
      %21 = sbr.rel (0) target = $region9
    $region8: #{tpu_custom_call.1} parent=1 // pred_region
      %22 = dma.done [#allocation3], 256
    $region9: #{tpu_custom_call.1} parent=1 // pred_fallthru
      _
    %v23 = vld [vmem:[#allocation2] sm:$0xff]
    %v24 = vld [vmem:[#allocation2 + $0x8] sm:$0xff]
    %v25 = vmul.f32 %v23, 0.25
    %v26 = vmul.f32 %v24, 0.25
    %v27 = vadd.f32 %v25, 0.5
    %v28 = vadd.f32 %v26, 0.5
    %v29 = vmax.f32 %v27, 0.0
    %v30 = vmax.f32 %v28, 0.0
    %v31 = vmin.f32 %v29, 1.0
    %v32 = vmin.f32 %v30, 1.0
    %33 = vst [vmem:[#allocation5] sm:$0xff] %v31
    %34 = vst [vmem:[#allocation5 + $0x8] sm:$0xff] %v32
    // Predicated region
    $region10: #{tpu_custom_call.1} parent=1 // pred_check
      _
    $region11: #{tpu_custom_call.1} parent=1 // pred_check_branch
      %36 = sbr.rel (0) target = $region13
    $region12: #{tpu_custom_call.1} parent=1 // pred_region
      %s38 = ssub.s32 256, 256
      %39 = vsyncadd [#allocation4], %s38
      %s40 = sshll.u32 [#allocation5], 4
      %s41 = int_to_ptr.vmem [resolvable:$true] %s40
      %46 = dma.vmem_to_hbm [thread:$0]  %s41, 256, %s1, [#allocation4], 128, 128, 8
    $region13: #{tpu_custom_call.1} parent=1 // pred_fallthru
      _
    // Predicated region
    $region14: #{tpu_custom_call.1} parent=1 // pred_check
      _
    $region15: #{tpu_custom_call.1} parent=1 // pred_check_branch
      %48 = sbr.rel (0) target = $region17
    $region16: #{tpu_custom_call.1} parent=1 // pred_region
      %49 = dma.done [#allocation4], 256
    $region17: #{tpu_custom_call.1} parent=1 // pred_fallthru
      _
    %50 = vsyncpa [#allocation3], 1
    %51 = vsyncpa [#allocation4], 1

</llo_original>
